<compile_context>
chip_gen: v7x
topology: tpu7x:2x2x1
jax: 0.10.0
libtpu: 0.0.40
codegen_flags: <defaults>
</compile_context>

<pallas_src>
import math

import jax
import jax.numpy as jnp
from jax.experimental import pallas as pl
from jax.experimental.pallas import tpu as pltpu


def _round_up(n: int, m: int) -> int:
    return (n + m - 1) // m * m


def _cdiv(a: int, b: int) -> int:
    return (a + b - 1) // b


def _tpu_generation_info():
    """Return (vmem_capacity_bytes, mxu_align) with conservative fallbacks."""
    kind = ""
    try:
        kind = jax.devices()[0].device_kind.lower()
    except Exception:
        pass
    mxu_align = 256 if ("v6" in kind or "7" in kind) else 128  # v5e MXU is 128-wide
    vmem_cap = None
    try:
        vmem_cap = int(pltpu.get_tpu_info().vmem_capacity_bytes)
    except Exception:
        vmem_cap = None
    if not vmem_cap:
        vmem_cap = (64 << 20) if "7" in kind else (128 << 20)
    return vmem_cap, mxu_align


def _pad_dim(d: int, align: int) -> int:
    p = _round_up(d, 128)
    if align > 128 and p > 128:
        p = _round_up(p, align)
    return p


def _vmem_estimate(TM, TH, Fp, Hp, n_h, x_bytes, out_bytes, cd_bytes):
    """Accurate VMEM accounting (per the perf review)."""
    if n_h == 1:
        w = 2 * Fp * Hp * cd_bytes            # Buffered(1): single copy of w1+w2
        b = (Hp + Fp) * 4                     # biases, single copy
    else:
        w = 2 * (2 * Fp * TH * cd_bytes)      # streamed w1+w2 tiles, double-buffered
        b = 2 * TH * 4 + Fp * 4               # b1 double-buffered, b2 single copy
    xo = 2 * TM * Fp * x_bytes + 2 * TM * Fp * out_bytes   # streamed x / out tiles
    acc = TM * Fp * 4                                       # f32 accumulator scratch
    inter = TM * TH * (4 + cd_bytes)                        # f32 GELU slab + bf16 copy
    return w + b + xo + acc + inter


_INV_SQRT2 = 1.0 / math.sqrt(2.0)


def mlp_kernel(x_ref, w1_ref, b1_ref, w2_ref, b2_ref, o_ref, acc_ref):
    # x_ref: (TM, Fp) native dtype   w1_ref: (Fp, TH) bf16   b1_ref: (1, TH) f32
    # w2_ref: (TH, Fp) bf16          b2_ref: (1, Fp) f32     o_ref: (TM, Fp)
    # acc_ref: (TM, Fp) f32 scratch, resident across the H grid axis.
    h_idx = pl.program_id(1)

    @pl.when(h_idx == 0)
    def _():
        acc_ref[...] = jnp.zeros_like(acc_ref)

    # fc1: cast x to bf16 in-kernel, bf16 x bf16 -> f32 accumulation on the MXU.
    x = x_ref[...].astype(w1_ref.dtype)
    h = jnp.dot(x, w1_ref[...], preferred_element_type=jnp.float32)
    h = h + b1_ref[...]

    # Exact (erf-based) GELU in f32 — matches torch.nn.functional.gelu default.
    h = 0.5 * h * (1.0 + jax.lax.erf(h * _INV_SQRT2))

    # dropout1: identity in eval mode.

    # fc2 partial product over this hidden tile, accumulated in f32.
    acc_ref[...] += jnp.dot(h.astype(w2_ref.dtype), w2_ref[...],
                            preferred_element_type=jnp.float32)

    @pl.when(h_idx == pl.num_programs(1) - 1)
    def _():
        # dropout2: identity in eval mode.
        o_ref[...] = (acc_ref[...] + b2_ref[...]).astype(o_ref.dtype)


def mlp_forward(x, w1, b1, w2, b2, *, tm=None, compute_dtype=jnp.bfloat16,
                out_dtype=None):
    """x: (batch, seq, F). Weights stored as (in, out); biases as (1, out)."""
    B, S, F = x.shape
    H = w1.shape[1]
    M = B * S
    out_dtype = out_dtype if out_dtype is not None else x.dtype

    vmem_cap, mxu_align = _tpu_generation_info()
    Fp = _pad_dim(F, mxu_align)
    Hp = _pad_dim(H, mxu_align)

    cd_bytes = jnp.dtype(compute_dtype).itemsize
    x_bytes = jnp.dtype(x.dtype).itemsize
    out_bytes = jnp.dtype(out_dtype).itemsize

    # ---- generation-aware tile selection ------------------------------------
    # Leave headroom below physical VMEM (v7x: 64 MiB/TC -> ~52 MiB; v5e/v6e:
    # 128 MiB -> ~108 MiB).  NOTE: megacore shards M across TCs but each TC
    # still needs its own weight copy in its private VMEM.
    cap = vmem_cap - ((12 << 20) if vmem_cap <= (64 << 20) else (20 << 20))
    cap = max(cap, 24 << 20)
    if tm is None:
        tm = 256 if vmem_cap <= (64 << 20) else 512
    tm = _round_up(tm, 16)                      # bf16 sublane packing (16 rows/vreg)
    TM0 = min(tm, _round_up(M, 16))

    th_cands, th = [Hp], Hp
    while th > 512:
        th = max(512, _round_up(_cdiv(th, 2), mxu_align))
        th_cands.append(th)

    choice = None
    for TM in (TM0, min(TM0, 256), min(TM0, 128)):
        for TH in th_cands:
            n_h = _cdiv(Hp, TH)
            Hp_eff = n_h * TH
            est = _vmem_estimate(TM, TH, Fp, Hp_eff, n_h, x_bytes, out_bytes, cd_bytes)
            if est <= cap:
                choice = (TM, TH, Hp_eff, n_h, est)
                break
        if choice is not None:
            break
    if choice is None:                          # last resort: smallest tiles
        TM, TH = min(TM0, 128), th_cands[-1]
        n_h = _cdiv(Hp, TH)
        Hp_eff = n_h * TH
        est = _vmem_estimate(TM, TH, Fp, Hp_eff, n_h, x_bytes, out_bytes, cd_bytes)
        choice = (TM, TH, Hp_eff, n_h, est)
    TM, TH, Hp_eff, n_h, est = choice

    grid_m = _cdiv(M, TM)                       # ragged last tile, no M padding copy
    grid = (grid_m, n_h)

    # ---- operand preparation (zero padding is mathematically inert) ----------
    x2d = x.reshape(M, F)
    if Fp != F:
        x2d = jnp.pad(x2d, ((0, 0), (0, Fp - F)))
    w1p = jnp.pad(w1, ((0, Fp - F), (0, Hp_eff - H))).astype(compute_dtype)
    b1p = jnp.pad(b1, ((0, 0), (0, Hp_eff - H))).astype(jnp.float32)
    w2p = jnp.pad(w2, ((0, Hp_eff - H), (0, Fp - F))).astype(compute_dtype)
    b2p = jnp.pad(b2, ((0, 0), (0, Fp - F))).astype(jnp.float32)

    vmem_limit = int(min(max(int(1.3 * est), 32 << 20), cap))

    cost = pl.CostEstimate(
        flops=4 * grid_m * TM * Fp * Hp_eff,          # two GEMMs @ 2*M*F*H each
        transcendentals=grid_m * TM * Hp_eff,         # erf per hidden activation
        bytes_accessed=(M * Fp * x_bytes
                        + (1 if n_h == 1 else grid_m) * 2 * Fp * Hp_eff * cd_bytes
                        + (Hp_eff + Fp) * 4
                        + M * Fp * out_bytes),
    )

    def _spec(shape, index_map, single_buffer=False):
        if single_buffer:
            try:
                return pl.BlockSpec(shape, index_map, pipeline_mode=pl.Buffered(1))
            except (TypeError, AttributeError):
                pass                                   # older jax: fall back to default
        return pl.BlockSpec(shape, index_map)

    invariant_w = (n_h == 1)   # weights grid-invariant -> single-buffer them
    in_specs = [
        pl.BlockSpec((TM, Fp), lambda i, h: (i, 0)),                         # x
        _spec((Fp, TH), lambda i, h: (0, h), single_buffer=invariant_w),      # w1
        _spec((1, TH), lambda i, h: (0, h), single_buffer=invariant_w),       # b1
        _spec((TH, Fp), lambda i, h: (h, 0), single_buffer=invariant_w),      # w2
        _spec((1, Fp), lambda i, h: (0, 0), single_buffer=True),              # b2
    ]

    out2d = pl.pallas_call(
        mlp_kernel,
        out_shape=jax.ShapeDtypeStruct((M, Fp), out_dtype),
        grid_spec=pltpu.PrefetchScalarGridSpec(
            num_scalar_prefetch=0,
            grid=grid,
            in_specs=in_specs,
            out_specs=pl.BlockSpec((TM, Fp), lambda i, h: (i, 0)),
            scratch_shapes=[pltpu.VMEM((TM, Fp), jnp.float32)],
        ),
        compiler_params=pltpu.CompilerParams(
            dimension_semantics=("parallel", "arbitrary"),
            vmem_limit_bytes=vmem_limit,
        ),
        cost_estimate=cost,
    )(x2d, w1p, b1p, w2p, b2p)

    return out2d[:, :F].reshape(B, S, F)


def init_params(key, num_features, expansion_factor):
    """Deterministic init mirroring nn.Linear's kaiming-uniform + bias bounds."""
    num_hidden = num_features * expansion_factor
    k1, k2, k3, k4 = jax.random.split(key, 4)

    bound1 = 1.0 / math.sqrt(num_features)
    # stored transposed relative to torch: (in, out)
    w1 = jax.random.uniform(k1, (num_features, num_hidden), jnp.float32,
                            minval=-bound1, maxval=bound1)
    b1 = jax.random.uniform(k2, (1, num_hidden), jnp.float32,
                            minval=-bound1, maxval=bound1)

    bound2 = 1.0 / math.sqrt(num_hidden)
    w2 = jax.random.uniform(k3, (num_hidden, num_features), jnp.float32,
                            minval=-bound2, maxval=bound2)
    b2 = jax.random.uniform(k4, (1, num_features), jnp.float32,
                            minval=-bound2, maxval=bound2)
    return w1, b1, w2, b2


def mlp_reference(x, w1, b1, w2, b2):
    h = jnp.einsum("bsf,fh->bsh", x, w1) + b1[0]
    h = 0.5 * h * (1.0 + jax.lax.erf(h / jnp.sqrt(2.0)))
    return jnp.einsum("bsh,hf->bsf", h, w2) + b2[0]


if __name__ == "__main__":
    batch, seq = 2, 8
    num_features, expansion_factor, dropout = 32, 4, 0.1  # dropout inert (eval mode)

    key = jax.random.PRNGKey(0)
    kx, kp = jax.random.split(key)

    x = jax.random.normal(kx, (batch, seq, num_features), jnp.float32)
    w1, b1, w2, b2 = init_params(kp, num_features, expansion_factor)

    out = mlp_forward(x, w1, b1, w2, b2)
    out = jax.block_until_ready(out)

    ref = mlp_reference(x, w1, b1, w2, b2)
    assert out.shape == (batch, seq, num_features)
    # bf16 operands with f32 accumulation: relax tolerance vs the all-f32 reference.
    assert jnp.allclose(out, ref, atol=5e-2, rtol=5e-2), float(
        jnp.max(jnp.abs(out - ref)))

    print("KERNEL_OK")
</pallas_src>

<mosaic_0001>
module attributes {stable_mosaic.version = 11 : i64} {
  func.func @mlp_kernel(%arg0: i32, %arg1: i32, %arg2: memref<16x128xf32, #tpu.memory_space<vmem>>, %arg3: memref<128x128xbf16, #tpu.memory_space<vmem>>, %arg4: memref<1x128xf32, #tpu.memory_space<vmem>>, %arg5: memref<128x128xbf16, #tpu.memory_space<vmem>>, %arg6: memref<1x128xf32, #tpu.memory_space<vmem>>, %arg7: memref<16x128xf32, #tpu.memory_space<vmem>>, %arg8: memref<16x128xf32, #tpu.memory_space<vmem>>) attributes {dimension_semantics = [#tpu.dimension_semantics<parallel>, #tpu.dimension_semantics<arbitrary>], iteration_bounds = array<i64: 1, 1>, scalar_prefetch = 0 : i64, scratch_operands = 1 : i64, tpu.core_type = #tpu.core_type<tc>, window_params = [{transform_indices = @transform_0, window_bounds = array<i64: 16, 128>}, {pipeline_mode = #tpu.pipeline_mode<synchronous>, transform_indices = @transform_1, window_bounds = array<i64: 128, 128>}, {pipeline_mode = #tpu.pipeline_mode<synchronous>, transform_indices = @transform_2, window_bounds = array<i64: 1, 128>}, {pipeline_mode = #tpu.pipeline_mode<synchronous>, transform_indices = @transform_3, window_bounds = array<i64: 128, 128>}, {pipeline_mode = #tpu.pipeline_mode<synchronous>, transform_indices = @transform_4, window_bounds = array<i64: 1, 128>}, {transform_indices = @transform_5, window_bounds = array<i64: 16, 128>}]} {
    %c0_i32 = arith.constant 0 : i32
    %0 = arith.cmpi eq, %arg1, %c0_i32 : i32
    %1 = arith.extui %0 : i1 to i32
    %c0_i32_0 = arith.constant 0 : i32
    %2 = arith.cmpi ne, %1, %c0_i32_0 : i32
    scf.if %2 {
      %cst_18 = arith.constant 0.000000e+00 : f32
      %27 = vector.broadcast %cst_18 : f32 to vector<16x128xf32>
      %c0_19 = arith.constant 0 : index
      %c0_20 = arith.constant 0 : index
      %28 = vector.load %arg8[%c0_19, %c0_20] : memref<16x128xf32, #tpu.memory_space<vmem>>, vector<16x128xf32>
      tpu.vector_store %arg8[%c0_19, %c0_20], %27 {strides = array<i32>} : memref<16x128xf32, #tpu.memory_space<vmem>>, vector<16x128xf32>,
    } else {
    }
    %c0 = arith.constant 0 : index
    %c0_1 = arith.constant 0 : index
    %3 = vector.load %arg2[%c0, %c0_1] : memref<16x128xf32, #tpu.memory_space<vmem>>, vector<16x128xf32>
    %4 = arith.truncf %3 : vector<16x128xf32> to vector<16x128xbf16>
    %c0_2 = arith.constant 0 : index
    %c0_3 = arith.constant 0 : index
    %5 = vector.load %arg3[%c0_2, %c0_3] : memref<128x128xbf16, #tpu.memory_space<vmem>>, vector<128x128xbf16>
    %cst = arith.constant dense<0.000000e+00> : vector<16x128xf32>
    %6 = tpu.matmul %4, %5, %cst {dimension_numbers = #tpu.dot_dimension_numbers<[1], [0], [0], [1], [0, 0, 1, 1], [], []>} : vector<16x128xbf16>, vector<128x128xbf16>, vector<16x128xf32> -> vector<16x128xf32>
    %c0_4 = arith.constant 0 : index
    %c0_5 = arith.constant 0 : index
    %7 = vector.load %arg4[%c0_4, %c0_5] : memref<1x128xf32, #tpu.memory_space<vmem>>, vector<1x128xf32>
    %8 = vector.broadcast %7 : vector<1x128xf32> to vector<16x128xf32>
    %9 = arith.addf %6, %8 : vector<16x128xf32>
    %cst_6 = arith.constant 5.000000e-01 : f32
    %10 = vector.broadcast %cst_6 : f32 to vector<16x128xf32>
    %11 = arith.mulf %10, %9 : vector<16x128xf32>
    %cst_7 = arith.constant 0.707106769 : f32
    %12 = vector.broadcast %cst_7 : f32 to vector<16x128xf32>
    %13 = arith.mulf %9, %12 : vector<16x128xf32>
    %14 = math.erf %13 : vector<16x128xf32>
    %cst_8 = arith.constant 1.000000e+00 : f32
    %15 = vector.broadcast %cst_8 : f32 to vector<16x128xf32>
    %16 = arith.addf %15, %14 : vector<16x128xf32>
    %17 = arith.mulf %11, %16 : vector<16x128xf32>
    %c0_9 = arith.constant 0 : index
    %c0_10 = arith.constant 0 : index
    %18 = vector.load %arg8[%c0_9, %c0_10] : memref<16x128xf32, #tpu.memory_space<vmem>>, vector<16x128xf32>
    %19 = arith.truncf %17 : vector<16x128xf32> to vector<16x128xbf16>
    %c0_11 = arith.constant 0 : index
    %c0_12 = arith.constant 0 : index
    %20 = vector.load %arg5[%c0_11, %c0_12] : memref<128x128xbf16, #tpu.memory_space<vmem>>, vector<128x128xbf16>
    %cst_13 = arith.constant dense<0.000000e+00> : vector<16x128xf32>
    %21 = tpu.matmul %19, %20, %cst_13 {dimension_numbers = #tpu.dot_dimension_numbers<[1], [0], [0], [1], [0, 0, 1, 1], [], []>} : vector<16x128xbf16>, vector<128x128xbf16>, vector<16x128xf32> -> vector<16x128xf32>
    %22 = arith.addf %18, %21 : vector<16x128xf32>
    %c0_14 = arith.constant 0 : index
    %c0_15 = arith.constant 0 : index
    %23 = vector.load %arg8[%c0_14, %c0_15] : memref<16x128xf32, #tpu.memory_space<vmem>>, vector<16x128xf32>
    tpu.vector_store %arg8[%c0_14, %c0_15], %22 {strides = array<i32>} : memref<16x128xf32, #tpu.memory_space<vmem>>, vector<16x128xf32>,
    %c0_i32_16 = arith.constant 0 : i32
    %24 = arith.cmpi eq, %arg1, %c0_i32_16 : i32
    %25 = arith.extui %24 : i1 to i32
    %c0_i32_17 = arith.constant 0 : i32
    %26 = arith.cmpi ne, %25, %c0_i32_17 : i32
    scf.if %26 {
      %c0_18 = arith.constant 0 : index
      %c0_19 = arith.constant 0 : index
      %27 = vector.load %arg8[%c0_18, %c0_19] : memref<16x128xf32, #tpu.memory_space<vmem>>, vector<16x128xf32>
      %c0_20 = arith.constant 0 : index
      %c0_21 = arith.constant 0 : index
      %28 = vector.load %arg6[%c0_20, %c0_21] : memref<1x128xf32, #tpu.memory_space<vmem>>, vector<1x128xf32>
      %29 = vector.broadcast %28 : vector<1x128xf32> to vector<16x128xf32>
      %30 = arith.addf %27, %29 : vector<16x128xf32>
      %c0_22 = arith.constant 0 : index
      %c0_23 = arith.constant 0 : index
      %31 = vector.load %arg7[%c0_22, %c0_23] : memref<16x128xf32, #tpu.memory_space<vmem>>, vector<16x128xf32>
      tpu.vector_store %arg7[%c0_22, %c0_23], %30 {strides = array<i32>} : memref<16x128xf32, #tpu.memory_space<vmem>>, vector<16x128xf32>,
    } else {
    }
    return
  }
  func.func @transform_0(%arg0: i32, %arg1: i32) -> (i32, i32) {
    %c0_i32 = arith.constant 0 : i32
    %c0_i32_0 = arith.constant 0 : i32
    return %arg0, %c0_i32 : i32, i32
  }
  func.func @transform_1(%arg0: i32, %arg1: i32) -> (i32, i32) {
    %c0_i32 = arith.constant 0 : i32
    %c0_i32_0 = arith.constant 0 : i32
    return %c0_i32, %arg1 : i32, i32
  }
  func.func @transform_2(%arg0: i32, %arg1: i32) -> (i32, i32) {
    %c0_i32 = arith.constant 0 : i32
    %c0_i32_0 = arith.constant 0 : i32
    return %c0_i32, %arg1 : i32, i32
  }
  func.func @transform_3(%arg0: i32, %arg1: i32) -> (i32, i32) {
    %c0_i32 = arith.constant 0 : i32
    %c0_i32_0 = arith.constant 0 : i32
    return %arg1, %c0_i32 : i32, i32
  }
  func.func @transform_4(%arg0: i32, %arg1: i32) -> (i32, i32) {
    %c0_i32 = arith.constant 0 : i32
    %c0_i32_0 = arith.constant 0 : i32
    %c0_i32_1 = arith.constant 0 : i32
    return %c0_i32, %c0_i32_0 : i32, i32
  }
  func.func @transform_5(%arg0: i32, %arg1: i32) -> (i32, i32) {
    %c0_i32 = arith.constant 0 : i32
    %c0_i32_0 = arith.constant 0 : i32
    return %arg0, %c0_i32 : i32, i32
  }
}

</mosaic_0001>

<llo_original>
// kernel: tpu_custom_call.1
$region0: #{tpu_custom_call.1}
  #allocation0 [shape = 'u32[]', space=smem, size = 0x4, offset = 0x4, fixed_abs, tag = 'smem constant byte address 0x4 - core index']
  #allocation1 [shape = 'u32[144,128]{1,0:T(1,128)}', space=vmem, size = 0x12000, scoped, tag = 'internal scratch']
  #allocation2 [shape = 'f32[16,128]{1,0:T(8,128)}', space=vmem, size = 0x2000, scoped, tag = 'scratch operand']
  %s0 = inlined_call_operand.hbm [shape: f32[16,128], index: 0, kind: input, shape index: {}]
  %s1 = inlined_call_operand.hbm [shape: bf16[128,128], index: 1, kind: input, shape index: {}]
  %s2 = inlined_call_operand.vmem [shape: f32[1,128], index: 2, kind: input, shape index: {}]
  %s3 = inlined_call_operand.hbm [shape: bf16[128,128], index: 3, kind: input, shape index: {}]
  %s4 = inlined_call_operand.vmem [shape: f32[1,128], index: 4, kind: input, shape index: {}]
  %s5 = inlined_call_operand.hbm [shape: f32[16,128], index: 5, kind: output, shape index: {}]
  %s6 = sld [smem:[#allocation0]]
  $region50: #{tpu_custom_call.1} parent=0
    _
  %s8 = ssub.s32 1, %s6
  %s9 = scalar_select 0, %s8, %s6
  $region1: #{tpu_custom_call.1} parent=0
    #allocation3 [shape = 'u8[8192]{0}', space=vmem, size = 0x2000, scoped, tag = 'input window, operand 0, single buffered']
    #allocation4 [shape = 's32[1]{0}', space=sflag, size = 0x4, scoped, tag = 'scoped memory for tpu_custom_call.1']
    #allocation5 [shape = 's32[1]{0}', space=sflag, size = 0x4, scoped, tag = 'scoped memory for tpu_custom_call.1']
    #allocation6 [shape = 'u8[32768]{0}', space=vmem, size = 0x8000, scoped, tag = 'input window, operand 1, single buffered']
    #allocation7 [shape = 's32[1]{0}', space=sflag, size = 0x4, scoped, tag = 'scoped memory for tpu_custom_call.1']
    #allocation8 [shape = 'u8[32768]{0}', space=vmem, size = 0x8000, scoped, tag = 'input window, operand 3, single buffered']
    #allocation9 [shape = 'u8[8192]{0}', space=vmem, size = 0x2000, scoped, tag = 'output window, operand 0, single buffered']
    %10 = vsyncpa [#allocation4], 0
    %11 = vsyncpa [#allocation7], 0
    %12 = vsyncpa [#allocation5], 0
    // Predicated region
    $region2: #{tpu_custom_call.1} parent=1 // pred_check
      _
    $region3: #{tpu_custom_call.1} parent=1 // pred_check_branch
      %14 = sbr.rel (0) target = $region5
    $region4: #{tpu_custom_call.1} parent=1 // pred_region
      %s16 = ssub.s32 256, 256
      %17 = vsyncadd [#allocation4], %s16
      %s18 = sshll.u32 [#allocation3], 4
      %s19 = int_to_ptr.vmem [resolvable:$true] %s18
      %24 = dma.hbm_to_vmem [thread:$0]  %s0, 256, %s19, [#allocation4], 128, 128, 8
    $region5: #{tpu_custom_call.1} parent=1 // pred_fallthru
      _
    // Predicated region
    $region6: #{tpu_custom_call.1} parent=1 // pred_check
      _
    $region7: #{tpu_custom_call.1} parent=1 // pred_check_branch
      %26 = sbr.rel (0) target = $region9
    $region8: #{tpu_custom_call.1} parent=1 // pred_region
      %s28 = ssub.s32 1024, 1024
      %29 = vsyncadd [#allocation7], %s28
      %s30 = sshll.u32 [#allocation6], 4
      %s31 = int_to_ptr.vmem [resolvable:$true] %s30
      %36 = dma.hbm_to_vmem [thread:$0]  %s1, 1024, %s31, [#allocation7], 64, 64, 4
    $region9: #{tpu_custom_call.1} parent=1 // pred_fallthru
      _
    // Predicated region
    $region10: #{tpu_custom_call.1} parent=1 // pred_check
      _
    $region11: #{tpu_custom_call.1} parent=1 // pred_check_branch
      %38 = sbr.rel (0) target = $region13
    $region12: #{tpu_custom_call.1} parent=1 // pred_region
      _
    $region13: #{tpu_custom_call.1} parent=1 // pred_fallthru
      _
    // Predicated region
    $region14: #{tpu_custom_call.1} parent=1 // pred_check
      _
    $region15: #{tpu_custom_call.1} parent=1 // pred_check_branch
      %40 = sbr.rel (0) target = $region17
    $region16: #{tpu_custom_call.1} parent=1 // pred_region
      %s42 = ssub.s32 1024, 1024
      %43 = vsyncadd [#allocation7], %s42
      %s44 = sshll.u32 [#allocation8], 4
      %s45 = int_to_ptr.vmem [resolvable:$true] %s44
      %50 = dma.hbm_to_vmem [thread:$0]  %s3, 1024, %s45, [#allocation7], 64, 64, 4
    $region17: #{tpu_custom_call.1} parent=1 // pred_fallthru
      _
    // Predicated region
    $region18: #{tpu_custom_call.1} parent=1 // pred_check
      _
    $region19: #{tpu_custom_call.1} parent=1 // pred_check_branch
      %52 = sbr.rel (0) target = $region21
    $region20: #{tpu_custom_call.1} parent=1 // pred_region
      _
    $region21: #{tpu_custom_call.1} parent=1 // pred_fallthru
      _
    // Predicated region
    $region22: #{tpu_custom_call.1} parent=1 // pred_check
      _
    $region23: #{tpu_custom_call.1} parent=1 // pred_check_branch
      %54 = sbr.rel (0) target = $region25
    $region24: #{tpu_custom_call.1} parent=1 // pred_region
      %55 = dma.done [#allocation4], 256
    $region25: #{tpu_custom_call.1} parent=1 // pred_fallthru
      _
    // Predicated region
    $region26: #{tpu_custom_call.1} parent=1 // pred_check
      _
    $region27: #{tpu_custom_call.1} parent=1 // pred_check_branch
      %57 = sbr.rel (0) target = $region29
    $region28: #{tpu_custom_call.1} parent=1 // pred_region
      %58 = dma.done [#allocation7], 1024
    $region29: #{tpu_custom_call.1} parent=1 // pred_fallthru
      _
    // Predicated region
    $region30: #{tpu_custom_call.1} parent=1 // pred_check
      _
    $region31: #{tpu_custom_call.1} parent=1 // pred_check_branch
      %60 = sbr.rel (0) target = $region33
    $region32: #{tpu_custom_call.1} parent=1 // pred_region
      %61 = dma.done [#allocation7], 1024
    $region33: #{tpu_custom_call.1} parent=1 // pred_fallthru
      _
    %p63 = scmp.eq.s32.totalorder 0, 0
    // Predicated region
    $region34: #{tpu_custom_call.1} parent=1 // pred_check
      %p64 = pneg %p63
    $region35: #{tpu_custom_call.1} parent=1 // pred_check_branch
      %66 = sbr.rel (%p64) target = $region37
    $region36: #{tpu_custom_call.1} parent=1 // pred_region
      %67 = vst [vmem:[#allocation2] sm:$0xff] 0.0
      %68 = vst [vmem:[#allocation2 + $0x8] sm:$0xff] 0.0
    $region37: #{tpu_custom_call.1} parent=1 // pred_fallthru
      _
    %v69 = vld [vmem:[#allocation3] sm:$0xff]
    %v70 = vld [vmem:[#allocation3 + $0x8] sm:$0xff]
    %v71 = vpack.c.bf16 %v70, %v69
    %v72 = vld [vmem:[#allocation6] sm:$0xf]
    %v73 = vld [vmem:[#allocation6 + $0x4] sm:$0xf]
    %v74 = vld [vmem:[#allocation6 + $0x8] sm:$0xf]
    %v75 = vld [vmem:[#allocation6 + $0xc] sm:$0xf]
    %v76 = vld [vmem:[#allocation6 + $0x10] sm:$0xf]
    %v77 = vld [vmem:[#allocation6 + $0x14] sm:$0xf]
    %v78 = vld [vmem:[#allocation6 + $0x18] sm:$0xf]
    %v79 = vld [vmem:[#allocation6 + $0x1c] sm:$0xf]
    %v80 = vld [vmem:[#allocation6 + $0x20] sm:$0xf]
    %v81 = vld [vmem:[#allocation6 + $0x24] sm:$0xf]
    %v82 = vld [vmem:[#allocation6 + $0x28] sm:$0xf]
    %v83 = vld [vmem:[#allocation6 + $0x2c] sm:$0xf]
    %v84 = vld [vmem:[#allocation6 + $0x30] sm:$0xf]
    %v85 = vld [vmem:[#allocation6 + $0x34] sm:$0xf]
    %v86 = vld [vmem:[#allocation6 + $0x38] sm:$0xf]
    %v87 = vld [vmem:[#allocation6 + $0x3c] sm:$0xf]
    %v88 = vld [vmem:[%s2] sm:$0x1]
    %v90 = vlaneseq
    %v91 = vshrl.u32 %v90, 7
    %v92 = vsub.s32 0, %v91
    %v93 = vrot.slane %v88, %v92
    %v111 = vunpack.c.l.b16 %v72
    %v112 = vunpack.c.l.b16 %v73
    %v113 = vunpack.c.l.b16 %v74
    %v114 = vunpack.c.l.b16 %v75
    %v115 = vunpack.c.l.b16 %v76
    %v116 = vunpack.c.l.b16 %v77
    %v117 = vunpack.c.l.b16 %v78
    %v118 = vunpack.c.l.b16 %v79
    %v119 = vunpack.c.l.b16 %v80
    %v120 = vunpack.c.l.b16 %v81
    %v121 = vunpack.c.l.b16 %v82
    %v122 = vunpack.c.l.b16 %v83
    %v123 = vunpack.c.l.b16 %v84
    %v124 = vunpack.c.l.b16 %v85
    %v125 = vunpack.c.l.b16 %v86
    %v126 = vunpack.c.l.b16 %v87
    %v127 = vpack.c.b16 %v112, %v111
    %v128 = vpack.c.b16 %v114, %v113
    %v129 = vpack.c.b16 %v116, %v115
    %v130 = vpack.c.b16 %v118, %v117
    %v131 = vpack.c.b16 %v120, %v119
    %v132 = vpack.c.b16 %v122, %v121
    %v133 = vpack.c.b16 %v124, %v123
    %v134 = vpack.c.b16 %v126, %v125
    %143 = vmatprep.subr.bf16.mxu0 0
    %144 = vmatpush1.bf16.msra.mxu0 %v127
    %145 = vmatprep.subr.bf16.mxu0 0
    %146 = vmatpush1.bf16.msra.mxu0 %v128
    %147 = vmatprep.subr.bf16.mxu0 0
    %148 = vmatpush1.bf16.msra.mxu0 %v129
    %149 = vmatprep.subr.bf16.mxu0 0
    %150 = vmatpush1.bf16.msra.mxu0 %v130
    %151 = vmatprep.subr.bf16.mxu0 0
    %152 = vmatpush1.bf16.msra.mxu0 %v131
    %153 = vmatprep.subr.bf16.mxu0 0
    %154 = vmatpush1.bf16.msra.mxu0 %v132
    %155 = vmatprep.subr.bf16.mxu0 0
    %156 = vmatpush1.bf16.msra.mxu0 %v133
    %157 = vmatprep.subr.bf16.mxu0 0
    %158 = vmatpush1.bf16.msra.mxu0 %v134
    %159 = vmatprep.subr.bf16.mxu0 0
    %160 = vmatpush1.bf16.msra.mxu0 0
    %161 = vmatprep.subr.bf16.mxu0 0
    %162 = vmatpush1.bf16.msra.mxu0 0
    %163 = vmatprep.subr.bf16.mxu0 0
    %164 = vmatpush1.bf16.msra.mxu0 0
    %165 = vmatprep.subr.bf16.mxu0 0
    %166 = vmatpush1.bf16.msra.mxu0 0
    %167 = vmatprep.subr.bf16.mxu0 0
    %168 = vmatpush1.bf16.msra.mxu0 0
    %169 = vmatprep.subr.bf16.mxu0 0
    %170 = vmatpush1.bf16.msra.mxu0 0
    %171 = vmatprep.subr.bf16.mxu0 0
    %172 = vmatpush1.bf16.msra.mxu0 0
    %173 = vmatprep.subr.bf16.mxu0 0
    %174 = vmatpush1.bf16.msra.mxu0 0
    %175 = vmatprep.mubr.bf16.mxu0 0
    %176 = vmatmul.mubr.bf16.gmra.mrb[0].mxu0 %v71
    %v177 = vpop.f32.mrb[0].mxu0
    %v178 = vadd.f32 %v93, %v177
    %v179 = vpop.f32.mrb[0].mxu0
    %v180 = vpop.f32.mrb[0].mxu0
    %v181 = vadd.f32 %v93, %v180
    %v182 = vpop.f32.mrb[0].mxu0
    %183 = vdwg.mxu0
    %v184 = vmul.f32 %v178, 0.5
    %v185 = vmul.f32 %v181, 0.5
    %v186 = vmul.f32 %v178, 0.70710677
    %v187 = vmul.f32 %v181, 0.70710677
    %v188 = verf.f32.pop %v186
    %v189 = verf.f32.pop %v187
    %v190 = vadd.f32 %v188, 1.0
    %v191 = vadd.f32 %v189, 1.0
    %v192 = vmul.f32 %v184, %v190
    %v193 = vmul.f32 %v185, %v191
    %v194 = vld [vmem:[#allocation2] sm:$0xff]
    %v195 = vld [vmem:[#allocation2 + $0x8] sm:$0xff]
    %v196 = vpack.c.bf16 %v193, %v192
    %v197 = vld [vmem:[#allocation8] sm:$0xf]
    %v198 = vld [vmem:[#allocation8 + $0x4] sm:$0xf]
    %v199 = vld [vmem:[#allocation8 + $0x8] sm:$0xf]
    %v200 = vld [vmem:[#allocation8 + $0xc] sm:$0xf]
    %v201 = vld [vmem:[#allocation8 + $0x10] sm:$0xf]
    %v202 = vld [vmem:[#allocation8 + $0x14] sm:$0xf]
    %v203 = vld [vmem:[#allocation8 + $0x18] sm:$0xf]
    %v204 = vld [vmem:[#allocation8 + $0x1c] sm:$0xf]
    %v205 = vld [vmem:[#allocation8 + $0x20] sm:$0xf]
    %v206 = vld [vmem:[#allocation8 + $0x24] sm:$0xf]
    %v207 = vld [vmem:[#allocation8 + $0x28] sm:$0xf]
    %v208 = vld [vmem:[#allocation8 + $0x2c] sm:$0xf]
    %v209 = vld [vmem:[#allocation8 + $0x30] sm:$0xf]
    %v210 = vld [vmem:[#allocation8 + $0x34] sm:$0xf]
    %v211 = vld [vmem:[#allocation8 + $0x38] sm:$0xf]
    %v212 = vld [vmem:[#allocation8 + $0x3c] sm:$0xf]
    %v229 = vunpack.c.l.b16 %v197
    %v230 = vunpack.c.l.b16 %v198
    %v231 = vunpack.c.l.b16 %v199
    %v232 = vunpack.c.l.b16 %v200
    %v233 = vunpack.c.l.b16 %v201
    %v234 = vunpack.c.l.b16 %v202
    %v235 = vunpack.c.l.b16 %v203
    %v236 = vunpack.c.l.b16 %v204
    %v237 = vunpack.c.l.b16 %v205
    %v238 = vunpack.c.l.b16 %v206
    %v239 = vunpack.c.l.b16 %v207
    %v240 = vunpack.c.l.b16 %v208
    %v241 = vunpack.c.l.b16 %v209
    %v242 = vunpack.c.l.b16 %v210
    %v243 = vunpack.c.l.b16 %v211
    %v244 = vunpack.c.l.b16 %v212
    %v245 = vpack.c.b16 %v230, %v229
    %v246 = vpack.c.b16 %v232, %v231
    %v247 = vpack.c.b16 %v234, %v233
    %v248 = vpack.c.b16 %v236, %v235
    %v249 = vpack.c.b16 %v238, %v237
    %v250 = vpack.c.b16 %v240, %v239
    %v251 = vpack.c.b16 %v242, %v241
    %v252 = vpack.c.b16 %v244, %v243
    %261 = vmatprep.subr.bf16.mxu0 0
    %262 = vmatpush1.bf16.msra.mxu0 %v245
    %263 = vmatprep.subr.bf16.mxu0 0
    %264 = vmatpush1.bf16.msra.mxu0 %v246
    %265 = vmatprep.subr.bf16.mxu0 0
    %266 = vmatpush1.bf16.msra.mxu0 %v247
    %267 = vmatprep.subr.bf16.mxu0 0
    %268 = vmatpush1.bf16.msra.mxu0 %v248
    %269 = vmatprep.subr.bf16.mxu0 0
    %270 = vmatpush1.bf16.msra.mxu0 %v249
    %271 = vmatprep.subr.bf16.mxu0 0
    %272 = vmatpush1.bf16.msra.mxu0 %v250
    %273 = vmatprep.subr.bf16.mxu0 0
    %274 = vmatpush1.bf16.msra.mxu0 %v251
    %275 = vmatprep.subr.bf16.mxu0 0
    %276 = vmatpush1.bf16.msra.mxu0 %v252
    %277 = vmatprep.subr.bf16.mxu0 0
    %278 = vmatpush1.bf16.msra.mxu0 0
    %279 = vmatprep.subr.bf16.mxu0 0
    %280 = vmatpush1.bf16.msra.mxu0 0
    %281 = vmatprep.subr.bf16.mxu0 0
    %282 = vmatpush1.bf16.msra.mxu0 0
    %283 = vmatprep.subr.bf16.mxu0 0
    %284 = vmatpush1.bf16.msra.mxu0 0
    %285 = vmatprep.subr.bf16.mxu0 0
    %286 = vmatpush1.bf16.msra.mxu0 0
    %287 = vmatprep.subr.bf16.mxu0 0
    %288 = vmatpush1.bf16.msra.mxu0 0
    %289 = vmatprep.subr.bf16.mxu0 0
    %290 = vmatpush1.bf16.msra.mxu0 0
    %291 = vmatprep.subr.bf16.mxu0 0
    %292 = vmatpush1.bf16.msra.mxu0 0
    %293 = vmatprep.mubr.bf16.mxu0 0
    %294 = vmatmul.mubr.bf16.gmra.mrb[0].mxu0 %v196
    %v295 = vpop.f32.mrb[0].mxu0
    %v296 = vadd.f32 0.0, %v295
    %v297 = vpop.f32.mrb[0].mxu0
    %v298 = vpop.f32.mrb[0].mxu0
    %v299 = vadd.f32 0.0, %v298
    %v300 = vpop.f32.mrb[0].mxu0
    %301 = vdwg.mxu0
    %v302 = vadd.f32 %v194, %v296
    %v303 = vadd.f32 %v195, %v299
    %304 = vst [vmem:[#allocation2] sm:$0xff] %v302
    %305 = vst [vmem:[#allocation2 + $0x8] sm:$0xff] %v303
    // Predicated region
    $region38: #{tpu_custom_call.1} parent=1 // pred_check
      %p306 = pneg %p63
    $region39: #{tpu_custom_call.1} parent=1 // pred_check_branch
      %308 = sbr.rel (%p306) target = $region41
    $region40: #{tpu_custom_call.1} parent=1 // pred_region
      %v309 = vld [vmem:[#allocation2] sm:$0xff]
      %v310 = vld [vmem:[#allocation2 + $0x8] sm:$0xff]
      %v311 = vld [vmem:[%s4] sm:$0x1]
      %v313 = vlaneseq
      %v314 = vshrl.u32 %v313, 7
      %v315 = vsub.s32 0, %v314
      %v316 = vrot.slane %v311, %v315
      %v318 = vadd.f32 %v309, %v316
      %v319 = vadd.f32 %v310, %v316
      %320 = vst [vmem:[#allocation9] sm:$0xff] %v318
      %321 = vst [vmem:[#allocation9 + $0x8] sm:$0xff] %v319
    $region41: #{tpu_custom_call.1} parent=1 // pred_fallthru
      _
    // Predicated region
    $region42: #{tpu_custom_call.1} parent=1 // pred_check
      _
    $region43: #{tpu_custom_call.1} parent=1 // pred_check_branch
      %323 = sbr.rel (0) target = $region45
    $region44: #{tpu_custom_call.1} parent=1 // pred_region
      %s325 = ssub.s32 256, 256
      %326 = vsyncadd [#allocation5], %s325
      %s327 = sshll.u32 [#allocation9], 4
      %s328 = int_to_ptr.vmem [resolvable:$true] %s327
      %333 = dma.vmem_to_hbm [thread:$0]  %s328, 256, %s5, [#allocation5], 128, 128, 8
    $region45: #{tpu_custom_call.1} parent=1 // pred_fallthru
      _
    // Predicated region
    $region46: #{tpu_custom_call.1} parent=1 // pred_check
      _
    $region47: #{tpu_custom_call.1} parent=1 // pred_check_branch
      %335 = sbr.rel (0) target = $region49
    $region48: #{tpu_custom_call.1} parent=1 // pred_region
      %336 = dma.done [#allocation5], 256
    $region49: #{tpu_custom_call.1} parent=1 // pred_fallthru
      _
    %337 = vsyncpa [#allocation4], 1
    %338 = vsyncpa [#allocation7], 1
    %339 = vsyncpa [#allocation5], 1

</llo_original>
